<compile_context>
chip_gen: v5e
topology: v5e:2x2
jax: 0.10.0
libtpu: 0.0.40
codegen_flags: <defaults>
</compile_context>

<pallas_src>
import functools

import jax
import jax.numpy as jnp
from jax import lax
from jax.experimental import pallas as pl
from jax.experimental.pallas import tpu as pltpu


def _round_up(a: int, b: int) -> int:
    return -(-a // b) * b


def _dense_act_kernel(x_ref, w_ref, b_ref, o_ref, *,
                      negative_slope: float, saturation: float):
    k = pl.program_id(2)
    k_last = pl.num_programs(2) - 1

    # x tile: (tm, tk); w tile: (tn, tk) in PyTorch layout -> contract dim 1 of both.
    contrib = lax.dot_general(
        x_ref[...], w_ref[...],
        dimension_numbers=(((1,), (1,)), ((), ())),
        preferred_element_type=jnp.float32,
    )

    @pl.when(k == 0)
    def _():
        # Initialize the resident output block with the first partial product + bias:
        # avoids a zero-fill pass and a separate bias-add pass.
        o_ref[...] = contrib + b_ref[...]

    @pl.when(k > 0)
    def _():
        o_ref[...] += contrib

    @pl.when(k == k_last)
    def _():
        z = o_ref[...]
        act = jnp.where(z >= 0, z, negative_slope * z)     # LeakyReLU
        o_ref[...] = jnp.minimum(act, saturation)          # clamp(max=saturation)


def dense_activation(x, weight, bias, *, negative_slope=0.1, saturation=20.0,
                     tm=None, tn=None, tk=None):
    """Fused y = clamp(leaky_relu(x @ weight.T + bias), max=saturation).

    x:      (M, K)  float
    weight: (N, K)  float  (PyTorch nn.Linear layout — NOT transposed here)
    bias:   (N,)    float
    Returns (M, N) float32.
    """
    M, K = x.shape
    N, K2 = weight.shape
    assert K == K2, "in_features mismatch"
    assert bias.shape == (N,), "bias shape mismatch"

    x = x.astype(jnp.float32)
    weight = weight.astype(jnp.float32)
    bias = bias.astype(jnp.float32)
    # TODO(synk): optionally cast x/weight to bf16 (keep f32 accumulation) on v6e/v7x
    # when tolerances permit — 2-4x MXU throughput and half the DMA bytes.

    # ---- Tile selection (hardware-aligned: tm % 8, tn % 128, tk % 128) ----
    tm = int(tm) if tm is not None else min(256, _round_up(M, 8))
    tn = int(tn) if tn is not None else min(512, _round_up(N, 128))
    tk = int(tk) if tk is not None else min(512, _round_up(K, 128))
    assert tm % 8 == 0, f"tm={tm} must be a multiple of 8"
    assert tn % 128 == 0, f"tn={tn} must be a multiple of 128"
    assert tk % 128 == 0, f"tk={tk} must be a multiple of 128"

    # ---- Pad problem dims up to tile multiples (zero padding on K is exact) ----
    Mp, Np, Kp = _round_up(M, tm), _round_up(N, tn), _round_up(K, tk)
    if (Mp, Kp) != (M, K):
        x = jnp.pad(x, ((0, Mp - M), (0, Kp - K)))
    if (Np, Kp) != (N, K):
        weight = jnp.pad(weight, ((0, Np - N), (0, Kp - K)))
    b2 = jnp.pad(bias, (0, Np - N)).reshape(1, Np)

    # ---- VMEM budget: double-buffered x, W, bias + resident output block ----
    tile_bytes = 4 * (2 * tm * tk + 2 * tn * tk + 2 * 1 * tn + 2 * tm * tn)
    vmem_limit = min(max(2 * tile_bytes, 16 * 1024 * 1024), 48 * 1024 * 1024)

    kernel = functools.partial(_dense_act_kernel,
                               negative_slope=float(negative_slope),
                               saturation=float(saturation))

    out = pl.pallas_call(
        kernel,
        out_shape=jax.ShapeDtypeStruct((Mp, Np), jnp.float32),
        grid_spec=pltpu.PrefetchScalarGridSpec(
            num_scalar_prefetch=0,
            grid=(Mp // tm, Np // tn, Kp // tk),
            in_specs=[
                pl.BlockSpec((tm, tk), lambda i, j, k: (i, k)),   # x tile
                pl.BlockSpec((tn, tk), lambda i, j, k: (j, k)),   # W tile (N, K) layout
                pl.BlockSpec((1, tn), lambda i, j, k: (0, j)),    # bias tile (k-invariant)
            ],
            out_specs=pl.BlockSpec((tm, tn), lambda i, j, k: (i, j)),
        ),
        compiler_params=pltpu.CompilerParams(
            dimension_semantics=("parallel", "parallel", "arbitrary"),
            vmem_limit_bytes=vmem_limit),
    )(x, weight, b2)

    return out[:M, :N]


def _reference(x, weight, bias, negative_slope, saturation):
    z = x.astype(jnp.float32) @ weight.astype(jnp.float32).T + bias.astype(jnp.float32)
    act = jnp.where(z >= 0, z, negative_slope * z)
    return jnp.minimum(act, saturation)


if __name__ == "__main__":
    negative_slope, saturation = 0.1, 20.0
    key = jax.random.PRNGKey(0)

    # Case 1: small shapes consistent with the module (batch=8, in=32, out=64).
    k1, k2, k3, key = jax.random.split(key, 4)
    batch, in_features, out_features = 8, 32, 64
    x = jax.random.normal(k1, (batch, in_features), dtype=jnp.float32)
    weight = 0.05 * jax.random.normal(k2, (out_features, in_features), dtype=jnp.float32)
    bound = 1.0 / (in_features ** 0.5)
    bias = jax.random.uniform(k3, (out_features,), minval=-bound, maxval=bound,
                              dtype=jnp.float32)

    out = jax.block_until_ready(
        dense_activation(x, weight, bias,
                         negative_slope=negative_slope, saturation=saturation))
    ref = _reference(x, weight, bias, negative_slope, saturation)
    assert out.shape == (batch, out_features)
    assert jnp.allclose(out, ref, atol=1e-5, rtol=1e-5), "mismatch vs reference (small)"

    # Case 2: multi-step grid on M/N/K with padding on N/K (exercises accumulate path).
    k1, k2, k3, key = jax.random.split(key, 4)
    M2, K2_, N2 = 512, 300, 200
    x2 = jax.random.normal(k1, (M2, K2_), dtype=jnp.float32)
    w2 = 0.05 * jax.random.normal(k2, (N2, K2_), dtype=jnp.float32)
    b2 = jax.random.uniform(k3, (N2,), minval=-0.05, maxval=0.05, dtype=jnp.float32)

    out2 = jax.block_until_ready(
        dense_activation(x2, w2, b2, negative_slope=negative_slope,
                         saturation=saturation, tm=256, tn=128, tk=128))
    ref2 = _reference(x2, w2, b2, negative_slope, saturation)
    assert out2.shape == (M2, N2)
    assert jnp.allclose(out2, ref2, atol=1e-4, rtol=1e-4), "mismatch vs reference (tiled)"

    print("KERNEL_OK")
</pallas_src>

<mosaic_0001>
module attributes {stable_mosaic.version = 11 : i64} {
  func.func @_dense_act_kernel(%arg0: i32, %arg1: i32, %arg2: i32, %arg3: memref<8x128xf32, #tpu.memory_space<vmem>>, %arg4: memref<128x128xf32, #tpu.memory_space<vmem>>, %arg5: memref<1x128xf32, #tpu.memory_space<vmem>>, %arg6: memref<8x128xf32, #tpu.memory_space<vmem>>) attributes {dimension_semantics = [#tpu.dimension_semantics<parallel>, #tpu.dimension_semantics<parallel>, #tpu.dimension_semantics<arbitrary>], iteration_bounds = array<i64: 1, 1, 1>, scalar_prefetch = 0 : i64, scratch_operands = 0 : i64, tpu.core_type = #tpu.core_type<tc>, window_params = [{transform_indices = @transform_0, window_bounds = array<i64: 8, 128>}, {transform_indices = @transform_1, window_bounds = array<i64: 128, 128>}, {transform_indices = @transform_2, window_bounds = array<i64: 1, 128>}, {transform_indices = @transform_3, window_bounds = array<i64: 8, 128>}]} {
    %c0 = arith.constant 0 : index
    %c0_0 = arith.constant 0 : index
    %0 = vector.load %arg3[%c0, %c0_0] : memref<8x128xf32, #tpu.memory_space<vmem>>, vector<8x128xf32>
    %c0_1 = arith.constant 0 : index
    %c0_2 = arith.constant 0 : index
    %1 = vector.load %arg4[%c0_1, %c0_2] : memref<128x128xf32, #tpu.memory_space<vmem>>, vector<128x128xf32>
    %cst = arith.constant dense<0.000000e+00> : vector<8x128xf32>
    %2 = tpu.matmul %0, %1, %cst {dimension_numbers = #tpu.dot_dimension_numbers<[1], [1], [0], [0], [0, 0, 1, 0], [], []>} : vector<8x128xf32>, vector<128x128xf32>, vector<8x128xf32> -> vector<8x128xf32>
    %c0_i32 = arith.constant 0 : i32
    %3 = arith.cmpi eq, %arg2, %c0_i32 : i32
    %4 = arith.extui %3 : i1 to i32
    %c0_i32_3 = arith.constant 0 : i32
    %5 = arith.cmpi ne, %4, %c0_i32_3 : i32
    scf.if %5 {
      %c0_8 = arith.constant 0 : index
      %c0_9 = arith.constant 0 : index
      %12 = vector.load %arg5[%c0_8, %c0_9] : memref<1x128xf32, #tpu.memory_space<vmem>>, vector<1x128xf32>
      %13 = vector.broadcast %12 : vector<1x128xf32> to vector<8x128xf32>
      %14 = arith.addf %2, %13 : vector<8x128xf32>
      %c0_10 = arith.constant 0 : index
      %c0_11 = arith.constant 0 : index
      %15 = vector.load %arg6[%c0_10, %c0_11] : memref<8x128xf32, #tpu.memory_space<vmem>>, vector<8x128xf32>
      tpu.vector_store %arg6[%c0_10, %c0_11], %14 {strides = array<i32>} : memref<8x128xf32, #tpu.memory_space<vmem>>, vector<8x128xf32>,
    } else {
    }
    %c0_i32_4 = arith.constant 0 : i32
    %6 = arith.cmpi sgt, %arg2, %c0_i32_4 : i32
    %7 = arith.extui %6 : i1 to i32
    %c0_i32_5 = arith.constant 0 : i32
    %8 = arith.cmpi ne, %7, %c0_i32_5 : i32
    scf.if %8 {
      %c0_8 = arith.constant 0 : index
      %c0_9 = arith.constant 0 : index
      %12 = vector.load %arg6[%c0_8, %c0_9] : memref<8x128xf32, #tpu.memory_space<vmem>>, vector<8x128xf32>
      %13 = arith.addf %12, %2 : vector<8x128xf32>
      %c0_10 = arith.constant 0 : index
      %c0_11 = arith.constant 0 : index
      %14 = vector.load %arg6[%c0_10, %c0_11] : memref<8x128xf32, #tpu.memory_space<vmem>>, vector<8x128xf32>
      tpu.vector_store %arg6[%c0_10, %c0_11], %13 {strides = array<i32>} : memref<8x128xf32, #tpu.memory_space<vmem>>, vector<8x128xf32>,
    } else {
    }
    %c0_i32_6 = arith.constant 0 : i32
    %9 = arith.cmpi eq, %arg2, %c0_i32_6 : i32
    %10 = arith.extui %9 : i1 to i32
    %c0_i32_7 = arith.constant 0 : i32
    %11 = arith.cmpi ne, %10, %c0_i32_7 : i32
    scf.if %11 {
      %c0_8 = arith.constant 0 : index
      %c0_9 = arith.constant 0 : index
      %12 = vector.load %arg6[%c0_8, %c0_9] : memref<8x128xf32, #tpu.memory_space<vmem>>, vector<8x128xf32>
      %cst_10 = arith.constant 0.000000e+00 : f32
      %13 = vector.broadcast %cst_10 : f32 to vector<8x128xf32>
      %14 = arith.cmpf oge, %12, %13 : vector<8x128xf32>
      %cst_11 = arith.constant 1.000000e-01 : f32
      %15 = vector.broadcast %cst_11 : f32 to vector<8x128xf32>
      %16 = arith.mulf %15, %12 : vector<8x128xf32>
      %17 = arith.select %14, %12, %16 : vector<8x128xi1>, vector<8x128xf32>
      %cst_12 = arith.constant 2.000000e+01 : f32
      %18 = vector.broadcast %cst_12 : f32 to vector<8x128xf32>
      %19 = arith.minimumf %17, %18 : vector<8x128xf32>
      %c0_13 = arith.constant 0 : index
      %c0_14 = arith.constant 0 : index
      %20 = vector.load %arg6[%c0_13, %c0_14] : memref<8x128xf32, #tpu.memory_space<vmem>>, vector<8x128xf32>
      tpu.vector_store %arg6[%c0_13, %c0_14], %19 {strides = array<i32>} : memref<8x128xf32, #tpu.memory_space<vmem>>, vector<8x128xf32>,
    } else {
    }
    return
  }
  func.func @transform_0(%arg0: i32, %arg1: i32, %arg2: i32) -> (i32, i32) {
    %c0_i32 = arith.constant 0 : i32
    return %arg0, %arg2 : i32, i32
  }
  func.func @transform_1(%arg0: i32, %arg1: i32, %arg2: i32) -> (i32, i32) {
    %c0_i32 = arith.constant 0 : i32
    return %arg1, %arg2 : i32, i32
  }
  func.func @transform_2(%arg0: i32, %arg1: i32, %arg2: i32) -> (i32, i32) {
    %c0_i32 = arith.constant 0 : i32
    %c0_i32_0 = arith.constant 0 : i32
    return %c0_i32, %arg1 : i32, i32
  }
  func.func @transform_3(%arg0: i32, %arg1: i32, %arg2: i32) -> (i32, i32) {
    %c0_i32 = arith.constant 0 : i32
    return %arg0, %arg1 : i32, i32
  }
}

</mosaic_0001>

<llo_original>
// kernel: tpu_custom_call.1
$region0: #{tpu_custom_call.1}
  #allocation0 [shape = 'u32[]', space=smem, size = 0x4, offset = 0x4, fixed_abs, tag = 'smem constant byte address 0x4 - core index']
  #allocation1 [shape = 'u32[72,128]{1,0:T(1,128)}', space=vmem, size = 0x9000, scoped, tag = 'internal scratch']
  %s0 = inlined_call_operand.hbm [shape: f32[8,128], index: 0, kind: input, shape index: {}]
  %s1 = inlined_call_operand.hbm [shape: f32[128,128], index: 1, kind: input, shape index: {}]
  %s2 = inlined_call_operand.vmem [shape: f32[1,128], index: 2, kind: input, shape index: {}]
  %s3 = inlined_call_operand.hbm [shape: f32[8,128], index: 3, kind: output, shape index: {}]
  %s4 = sld [smem:[#allocation0]]
  $region42: #{tpu_custom_call.1} parent=0
    _
  %s6 = ssub.s32 1, %s4
  %s7 = scalar_select 0, %s6, %s4
  $region1: #{tpu_custom_call.1} parent=0
    #allocation2 [shape = 'u8[4096]{0}', space=vmem, size = 0x1000, scoped, tag = 'input window, operand 0, single buffered']
    #allocation3 [shape = 's32[1]{0}', space=sflag, size = 0x4, scoped, tag = 'scoped memory for tpu_custom_call.1']
    #allocation4 [shape = 's32[1]{0}', space=sflag, size = 0x4, scoped, tag = 'scoped memory for tpu_custom_call.1']
    #allocation5 [shape = 'u8[65536]{0}', space=vmem, size = 0x10000, scoped, tag = 'input window, operand 1, single buffered']
    #allocation6 [shape = 's32[1]{0}', space=sflag, size = 0x4, scoped, tag = 'scoped memory for tpu_custom_call.1']
    #allocation7 [shape = 'u8[4096]{0}', space=vmem, size = 0x1000, scoped, tag = 'output window, operand 0, single buffered']
    %8 = vsyncpa [#allocation3], 0
    %9 = vsyncpa [#allocation6], 0
    %10 = vsyncpa [#allocation4], 0
    // Predicated region
    $region2: #{tpu_custom_call.1} parent=1 // pred_check
      _
    $region3: #{tpu_custom_call.1} parent=1 // pred_check_branch
      %12 = sbr.rel (0) target = $region5
    $region4: #{tpu_custom_call.1} parent=1 // pred_region
      %14 = vsyncadd [#allocation3], 0
      %s16 = sshll.u32 %s0, 4
      %s17 = int_to_ptr.hbm [resolvable:$true] %s16
      %s18 = sshll.u32 [#allocation2], 4
      %s19 = int_to_ptr.vmem [resolvable:$true] %s18
      %21 = dma.hbm_to_vmem [thread:$0]  %s17, 128, %s19, [#allocation3]
    $region5: #{tpu_custom_call.1} parent=1 // pred_fallthru
      _
    // Predicated region
    $region6: #{tpu_custom_call.1} parent=1 // pred_check
      _
    $region7: #{tpu_custom_call.1} parent=1 // pred_check_branch
      %23 = sbr.rel (0) target = $region9
    $region8: #{tpu_custom_call.1} parent=1 // pred_region
      %25 = vsyncadd [#allocation6], 0
      %s26 = sshll.u32 %s1, 4
      %s27 = int_to_ptr.hbm [resolvable:$true] %s26
      %s28 = sshll.u32 [#allocation5], 4
      %s29 = int_to_ptr.vmem [resolvable:$true] %s28
      %34 = dma.hbm_to_vmem [thread:$0]  %s27, 2048, %s29, [#allocation6], 128, 128, 8
    $region9: #{tpu_custom_call.1} parent=1 // pred_fallthru
      _
    // Predicated region
    $region10: #{tpu_custom_call.1} parent=1 // pred_check
      _
    $region11: #{tpu_custom_call.1} parent=1 // pred_check_branch
      %36 = sbr.rel (0) target = $region13
    $region12: #{tpu_custom_call.1} parent=1 // pred_region
      _
    $region13: #{tpu_custom_call.1} parent=1 // pred_fallthru
      _
    // Predicated region
    $region14: #{tpu_custom_call.1} parent=1 // pred_check
      _
    $region15: #{tpu_custom_call.1} parent=1 // pred_check_branch
      %38 = sbr.rel (0) target = $region17
    $region16: #{tpu_custom_call.1} parent=1 // pred_region
      %40 = dma.done [#allocation3], 128
    $region17: #{tpu_custom_call.1} parent=1 // pred_fallthru
      _
    // Predicated region
    $region18: #{tpu_custom_call.1} parent=1 // pred_check
      _
    $region19: #{tpu_custom_call.1} parent=1 // pred_check_branch
      %42 = sbr.rel (0) target = $region21
    $region20: #{tpu_custom_call.1} parent=1 // pred_region
      %44 = dma.done [#allocation6], 2048
    $region21: #{tpu_custom_call.1} parent=1 // pred_fallthru
      _
    %v45 = vld [vmem:[#allocation2] sm:$0xff]
    %v46 = vld [vmem:[#allocation5] sm:$0xff]
    %v47 = vld [vmem:[#allocation5 + $0x8] sm:$0xff]
    %v48 = vld [vmem:[#allocation5 + $0x10] sm:$0xff]
    %v49 = vld [vmem:[#allocation5 + $0x18] sm:$0xff]
    %v50 = vld [vmem:[#allocation5 + $0x20] sm:$0xff]
    %v51 = vld [vmem:[#allocation5 + $0x28] sm:$0xff]
    %v52 = vld [vmem:[#allocation5 + $0x30] sm:$0xff]
    %v53 = vld [vmem:[#allocation5 + $0x38] sm:$0xff]
    %v54 = vld [vmem:[#allocation5 + $0x40] sm:$0xff]
    %v55 = vld [vmem:[#allocation5 + $0x48] sm:$0xff]
    %v56 = vld [vmem:[#allocation5 + $0x50] sm:$0xff]
    %v57 = vld [vmem:[#allocation5 + $0x58] sm:$0xff]
    %v58 = vld [vmem:[#allocation5 + $0x60] sm:$0xff]
    %v59 = vld [vmem:[#allocation5 + $0x68] sm:$0xff]
    %v60 = vld [vmem:[#allocation5 + $0x70] sm:$0xff]
    %v61 = vld [vmem:[#allocation5 + $0x78] sm:$0xff]
    %62 = vmatpush.xpose.msra.mxu0 %v61
    %63 = vmatpush.xpose.msra.mxu0 %v60
    %64 = vmatpush.xpose.msra.mxu0 %v59
    %65 = vmatpush.xpose.msra.mxu0 %v58
    %66 = vmatpush.xpose.msra.mxu0 %v57
    %67 = vmatpush.xpose.msra.mxu0 %v56
    %68 = vmatpush.xpose.msra.mxu0 %v55
    %69 = vmatpush.xpose.msra.mxu0 %v54
    %70 = vmatpush.xpose.msra.mxu0 %v53
    %71 = vmatpush.xpose.msra.mxu0 %v52
    %72 = vmatpush.xpose.msra.mxu0 %v51
    %73 = vmatpush.xpose.msra.mxu0 %v50
    %74 = vmatpush.xpose.msra.mxu0 %v49
    %75 = vmatpush.xpose.msra.mxu0 %v48
    %76 = vmatpush.xpose.msra.mxu0 %v47
    %77 = vmatpush.xpose.msra.mxu0 %v46
    %78 = vmatmul.f32.gmra.mxu0 %v45
    %v79 = vpop.f32.mrf.mxu0
    %v80 = vadd.f32 0.0, %v79
    %81 = vdwg.mxu0
    %p82 = scmp.eq.s32.totalorder 0, 0
    // Predicated region
    $region22: #{tpu_custom_call.1} parent=1 // pred_check
      %p83 = pneg %p82
    $region23: #{tpu_custom_call.1} parent=1 // pred_check_branch
      %85 = sbr.rel (%p83) target = $region25
    $region24: #{tpu_custom_call.1} parent=1 // pred_region
      %v86 = vld [vmem:[%s2] sm:$0x1]
      %v88 = vperm.slane %v86, 0
      %v90 = vadd.f32 %v80, %v88
      %91 = vst [vmem:[#allocation7] sm:$0xff] %v90
    $region25: #{tpu_custom_call.1} parent=1 // pred_fallthru
      _
    %p92 = scmp.gt.s32.totalorder 0, 0
    // Predicated region
    $region26: #{tpu_custom_call.1} parent=1 // pred_check
      %p93 = pneg %p92
    $region27: #{tpu_custom_call.1} parent=1 // pred_check_branch
      %95 = sbr.rel (%p93) target = $region29
    $region28: #{tpu_custom_call.1} parent=1 // pred_region
      %v96 = vld [vmem:[#allocation7] sm:$0xff]
      %v97 = vadd.f32 %v96, %v80
      %98 = vst [vmem:[#allocation7] sm:$0xff] %v97
    $region29: #{tpu_custom_call.1} parent=1 // pred_fallthru
      _
    // Predicated region
    $region30: #{tpu_custom_call.1} parent=1 // pred_check
      %p99 = pneg %p82
    $region31: #{tpu_custom_call.1} parent=1 // pred_check_branch
      %101 = sbr.rel (%p99) target = $region33
    $region32: #{tpu_custom_call.1} parent=1 // pred_region
      %v102 = vld [vmem:[#allocation7] sm:$0xff]
      %vm103 = vcmp.ge.f32.partialorder %v102, 0.0
      %v104 = vmul.f32 %v102, 0.1
      %v105 = vsel %vm103, %v102, %v104
      %v106 = vmin.f32 %v105, 20.0
      %107 = vst [vmem:[#allocation7] sm:$0xff] %v106
    $region33: #{tpu_custom_call.1} parent=1 // pred_fallthru
      _
    // Predicated region
    $region34: #{tpu_custom_call.1} parent=1 // pred_check
      _
    $region35: #{tpu_custom_call.1} parent=1 // pred_check_branch
      %109 = sbr.rel (0) target = $region37
    $region36: #{tpu_custom_call.1} parent=1 // pred_region
      %111 = vsyncadd [#allocation4], 0
      %s113 = sshll.u32 [#allocation7], 4
      %s114 = int_to_ptr.vmem [resolvable:$true] %s113
      %s115 = sshll.u32 %s3, 4
      %s116 = int_to_ptr.hbm [resolvable:$true] %s115
      %118 = dma.vmem_to_hbm [thread:$0]  %s114, 128, %s116, [#allocation4]
    $region37: #{tpu_custom_call.1} parent=1 // pred_fallthru
      _
    // Predicated region
    $region38: #{tpu_custom_call.1} parent=1 // pred_check
      _
    $region39: #{tpu_custom_call.1} parent=1 // pred_check_branch
      %120 = sbr.rel (0) target = $region41
    $region40: #{tpu_custom_call.1} parent=1 // pred_region
      %122 = dma.done [#allocation4], 128
    $region41: #{tpu_custom_call.1} parent=1 // pred_fallthru
      _
    %123 = vsyncpa [#allocation3], 1
    %124 = vsyncpa [#allocation6], 1
    %125 = vsyncpa [#allocation4], 1

</llo_original>
